<compile_context>
chip_gen: v6e
topology: v6e:2x2x1
jax: 0.10.0
libtpu: 0.0.40
codegen_flags: <defaults>
</compile_context>

<pallas_src>
import functools

import jax
import jax.numpy as jnp
from jax.experimental import pallas as pl
from jax.experimental.pallas import tpu as pltpu


def _sigmoid_kernel(x_ref, o_ref):
    # Keep HBM traffic at the native dtype width; compute in f32 in-kernel
    # (safe on v5e which lacks bf16 VPU/EUP, accurate for all inputs).
    x = x_ref[...].astype(jnp.float32)
    # sigmoid(x) == 0.5 * tanh(0.5 * x) + 0.5  -- one EUP op in a free slot.
    o_ref[...] = (0.5 * jnp.tanh(0.5 * x) + 0.5).astype(o_ref.dtype)


def _tpu_tile_defaults():
    """(max_tile_bytes, vmem_limit_bytes) tuned per TPU generation."""
    try:
        kind = jax.devices()[0].device_kind.lower()
    except Exception:
        kind = ""
    if "v7" in kind or "tpu7" in kind:
        # v7x: ~3.2 TB/s HBM per TC -> larger tiles to amortize the ~0.35us
        # per-step overhead. (in + out) x 2 buffers at 4 MiB = 16 MiB; give
        # explicit headroom under the 32 MiB scoped default.
        return 4 * 1024 * 1024, 28 * 1024 * 1024
    # v5e / v6e: 2 MiB tiles already sit at ~85%+ of HBM roofline and keep
    # (in + out) x 2 = 8 MiB well under the 16 MiB scoped-VMEM default.
    return 2 * 1024 * 1024, None


def _round_up(a, g):
    return ((a + g - 1) // g) * g


@functools.partial(
    jax.jit,
    static_argnames=("max_tile_bytes", "min_pallas_elements", "force_pallas"),
)
def my_sigmoid(x, *, max_tile_bytes=None, min_pallas_elements=256 * 1024,
               force_pallas=False):
    """Elementwise sigmoid via a Pallas TPU kernel. Any shape / float dtype."""
    orig_shape = x.shape
    dtype = x.dtype
    n = x.size

    if n == 0:
        return x

    # Small-input escape hatch: kernel-launch + DMA-setup overhead dwarfs the
    # memory traffic, and XLA fuses a plain elementwise sigmoid for free.
    if (not force_pallas) and n < min_pallas_elements:
        xf = x.astype(jnp.float32)
        return (0.5 * jnp.tanh(0.5 * xf) + 0.5).astype(dtype)

    default_tile, vmem_limit = _tpu_tile_defaults()
    if max_tile_bytes is None:
        max_tile_bytes = default_tile

    itemsize = jnp.dtype(dtype).itemsize
    # Sub-32-bit dtypes pack along sublanes: keep whole packed sublane tiles
    # so stores stay full-width (8 for f32, 16 for bf16, 32 for int8/fp8).
    sub_granule = max(8, 32 // itemsize)

    compiler_params = pltpu.CompilerParams(
        dimension_semantics=("parallel",),
        vmem_limit_bytes=vmem_limit,
    )

    flat = jnp.ravel(x)  # free (contiguous) reshape, no extra HBM pass

    if n % 128 == 0:
        # ---- Fast path: lane-dense 2D slab -------------------------------
        lanes = next(l for l in (1024, 512, 256, 128) if n % l == 0)
        rows = n // lanes
        max_br = max(
            sub_granule,
            (max_tile_bytes // (lanes * itemsize)) // sub_granule * sub_granule,
        )
        if rows <= sub_granule:
            block_rows = rows  # full-extent block: (8,128) rule satisfied
        else:
            # Aim for >= 2 grid steps (pipelining + v7x dual-TC sharding).
            # No divisibility requirement: the ragged last block is masked.
            block_rows = min(max_br, _round_up((rows + 1) // 2, sub_granule))
        grid = (pl.cdiv(rows, block_rows),)

        idx = lambda i: (i, 0)
        out2d = pl.pallas_call(
            _sigmoid_kernel,
            out_shape=jax.ShapeDtypeStruct((rows, lanes), dtype),
            grid=grid,
            in_specs=[pl.BlockSpec((block_rows, lanes), idx)],
            out_specs=pl.BlockSpec((block_rows, lanes), idx),
            compiler_params=compiler_params,
        )(flat.reshape(rows, lanes))
        return out2d.reshape(orig_shape)

    # ---- Ragged path (n % 128 != 0): flat 1-D, cdiv grid, masked edge -----
    # No jnp.pad and no output slice: exactly one HBM read + one HBM write.
    lane_granule = 128 * sub_granule
    max_chunk = max(
        lane_granule,
        (max_tile_bytes // itemsize) // lane_granule * lane_granule,
    )
    if n <= lane_granule:
        chunk = n  # full-extent 1-D block
    else:
        chunk = min(max_chunk, _round_up((n + 1) // 2, lane_granule))
    grid = (pl.cdiv(n, chunk),)

    out1d = pl.pallas_call(
        _sigmoid_kernel,
        out_shape=jax.ShapeDtypeStruct((n,), dtype),
        grid=grid,
        in_specs=[pl.BlockSpec((chunk,), lambda i: (i,))],
        out_specs=pl.BlockSpec((chunk,), lambda i: (i,)),
        compiler_params=compiler_params,
    )(flat)
    return out1d.reshape(orig_shape)


if __name__ == "__main__":
    key = jax.random.PRNGKey(0)
    k1, k2, k3, k4, k5 = jax.random.split(key, 5)

    def ref_sigmoid(v):
        vf = v.astype(jnp.float32)
        return (1.0 / (1.0 + jnp.exp(-vf))).astype(v.dtype)

    # 1) Spec-sized input (2,4,16,16), forced through the Pallas fast path.
    x = jax.random.normal(k1, (2, 4, 16, 16), dtype=jnp.float32)
    y = my_sigmoid(x, force_pallas=True)
    jax.block_until_ready(y)
    assert y.shape == x.shape and y.dtype == x.dtype
    assert jnp.allclose(y, ref_sigmoid(x), atol=1e-5, rtol=1e-5)

    # 2) Default path (above the small-input threshold); rows don't divide the
    #    block -> exercises the masked 2D edge block and the >=2-step grid.
    x_big = jax.random.normal(k2, (1040, 512), dtype=jnp.float32)
    y_big = my_sigmoid(x_big)
    jax.block_until_ready(y_big)
    assert jnp.allclose(y_big, ref_sigmoid(x_big), atol=1e-5, rtol=1e-5)

    # 3) n not a multiple of 128: copy-free 1-D path, single full block.
    x_odd = jax.random.normal(k3, (3, 5, 7), dtype=jnp.float32)
    y_odd = my_sigmoid(x_odd, force_pallas=True)
    jax.block_until_ready(y_odd)
    assert y_odd.shape == x_odd.shape and y_odd.dtype == x_odd.dtype
    assert jnp.allclose(y_odd, ref_sigmoid(x_odd), atol=1e-5, rtol=1e-5)

    # 4) Ragged multi-block 1-D path (tiny tile budget forces a cdiv grid with
    #    a masked final block).
    x_rag = jax.random.normal(k4, (37, 91), dtype=jnp.float32)
    y_rag = my_sigmoid(x_rag, force_pallas=True, max_tile_bytes=4096)
    jax.block_until_ready(y_rag)
    assert jnp.allclose(y_rag, ref_sigmoid(x_rag), atol=1e-5, rtol=1e-5)

    # 5) bf16 input: dtype-aware sublane granule (16) and in-kernel f32 math.
    x_bf = jax.random.normal(k5, (520, 512)).astype(jnp.bfloat16)
    y_bf = my_sigmoid(x_bf)
    jax.block_until_ready(y_bf)
    y_bf_ref = ref_sigmoid(x_bf)
    assert y_bf.dtype == jnp.bfloat16
    assert jnp.allclose(y_bf.astype(jnp.float32), y_bf_ref.astype(jnp.float32),
                        atol=2e-2, rtol=2e-2)

    print("KERNEL_OK")
</pallas_src>

<mosaic_0001>
module attributes {stable_mosaic.version = 11 : i64} {
  func.func @_sigmoid_kernel(%arg0: i32, %arg1: memref<2x1024xf32, #tpu.memory_space<vmem>>, %arg2: memref<2x1024xf32, #tpu.memory_space<vmem>>) attributes {dimension_semantics = [#tpu.dimension_semantics<parallel>], iteration_bounds = array<i64: 1>, scalar_prefetch = 0 : i64, scratch_operands = 0 : i64, tpu.core_type = #tpu.core_type<tc>, window_params = [{transform_indices = @transform_0, window_bounds = array<i64: 2, 1024>}, {transform_indices = @transform_1, window_bounds = array<i64: 2, 1024>}]} {
    %c0 = arith.constant 0 : index
    %c0_0 = arith.constant 0 : index
    %0 = vector.load %arg1[%c0, %c0_0] : memref<2x1024xf32, #tpu.memory_space<vmem>>, vector<2x1024xf32>
    %cst = arith.constant 5.000000e-01 : f32
    %1 = vector.broadcast %cst : f32 to vector<2x1024xf32>
    %2 = arith.mulf %1, %0 : vector<2x1024xf32>
    %3 = math.tanh %2 : vector<2x1024xf32>
    %cst_1 = arith.constant 5.000000e-01 : f32
    %4 = vector.broadcast %cst_1 : f32 to vector<2x1024xf32>
    %5 = arith.mulf %4, %3 : vector<2x1024xf32>
    %cst_2 = arith.constant 5.000000e-01 : f32
    %6 = vector.broadcast %cst_2 : f32 to vector<2x1024xf32>
    %7 = arith.addf %5, %6 : vector<2x1024xf32>
    %c0_3 = arith.constant 0 : index
    %c0_4 = arith.constant 0 : index
    %8 = vector.load %arg2[%c0_3, %c0_4] : memref<2x1024xf32, #tpu.memory_space<vmem>>, vector<2x1024xf32>
    tpu.vector_store %arg2[%c0_3, %c0_4], %7 {strides = array<i32>} : memref<2x1024xf32, #tpu.memory_space<vmem>>, vector<2x1024xf32>,
    return
  }
  func.func @transform_0(%arg0: i32) -> (i32, i32) {
    %c0_i32 = arith.constant 0 : i32
    %c0_i32_0 = arith.constant 0 : i32
    return %arg0, %c0_i32 : i32, i32
  }
  func.func @transform_1(%arg0: i32) -> (i32, i32) {
    %c0_i32 = arith.constant 0 : i32
    %c0_i32_0 = arith.constant 0 : i32
    return %arg0, %c0_i32 : i32, i32
  }
}

</mosaic_0001>

<llo_original>
// kernel: my_sigmoid.1
$region0: #{my_sigmoid.1}
  #allocation0 [shape = 'u32[]', space=smem, size = 0x4, offset = 0x4, fixed_abs, tag = 'smem constant byte address 0x4 - core index']
  #allocation1 [shape = 'u32[144,128]{1,0:T(1,128)}', space=vmem, size = 0x12000, scoped, tag = 'internal scratch']
  %s0 = inlined_call_operand.vmem [shape: f32[2,1024], index: 0, kind: input, shape index: {}]
  %s1 = inlined_call_operand.vmem [shape: f32[2,1024], index: 1, kind: output, shape index: {}]
  %s2 = sld [smem:[#allocation0]]
  $region14: #{my_sigmoid.1} parent=0
    _
  %s4 = ssub.s32 1, %s2
  %s5 = scalar_select 0, %s4, %s2
  // Predicated region
  $region2: #{my_sigmoid.1} parent=0 // pred_check
    _
  $region3: #{my_sigmoid.1} parent=0 // pred_check_branch
    %7 = sbr.rel (0) target = $region5
  $region4: #{my_sigmoid.1} parent=0 // pred_region
    _
  $region5: #{my_sigmoid.1} parent=0 // pred_fallthru
    _
  %v8 = vld [vmem:[%s0] sm:$0xff]
  %v9 = vld [vmem:[%s0 + $0x8] sm:$0xff]
  %v10 = vmul.f32 %v8, 0.5
  %v11 = vmul.f32 %v9, 0.5
  %v12 = vtanh.pop %v10
  %v13 = vtanh.pop %v11
  %v14 = vmul.f32 %v12, 0.5
  %v15 = vmul.f32 %v13, 0.5
  %v16 = vadd.f32 %v14, 0.5
  %v17 = vadd.f32 %v15, 0.5
  %18 = vst [vmem:[%s1] sm:$0xff] %v16
  %19 = vst [vmem:[%s1 + $0x8] sm:$0xff] %v17
  // Predicated region
  $region6: #{my_sigmoid.1} parent=0 // pred_check
    _
  $region7: #{my_sigmoid.1} parent=0 // pred_check_branch
    %21 = sbr.rel (0) target = $region9
  $region8: #{my_sigmoid.1} parent=0 // pred_region
    _
  $region9: #{my_sigmoid.1} parent=0 // pred_fallthru
    _
  // Predicated region
  $region10: #{my_sigmoid.1} parent=0 // pred_check
    _
  $region11: #{my_sigmoid.1} parent=0 // pred_check_branch
    %23 = sbr.rel (0) target = $region13
  $region12: #{my_sigmoid.1} parent=0 // pred_region
    _
  $region13: #{my_sigmoid.1} parent=0 // pred_fallthru
    _

</llo_original>
